<compile_context>
chip_gen: v5e
topology: v5e:2x2
jax: 0.10.0
libtpu: 0.0.40
codegen_flags: <defaults>
</compile_context>

<pallas_src>
import numpy as np
import jax
import jax.numpy as jnp
from jax.experimental import pallas as pl
from jax.experimental.pallas import tpu as pltpu

LANE = 128  # TPU lane width; hidden/feature dims are padded to this


# ----------------------------- Pallas kernel ------------------------------ #
def _shadow_fused_kernel(a_ref, x_ref, r_ref,
                         w1_ref, b1_ref, w2_ref, b2_ref, w3_ref, b3_ref,
                         o_ref):
    """Fused 3x(SAGEConv + ReLU) + root-node readout; everything VMEM-resident."""
    a = a_ref[...]                                   # [N, N] mean-agg operator

    def sage_relu(h, w_ref, b_ref):
        # mean aggregation over in-neighbors (dense matmul on the MXU)
        agg = jnp.dot(a, h, preferred_element_type=jnp.float32)          # [N, LANE]
        # merged lin_l / lin_r matmul: [agg | h] @ [[W_l]; [W_r]] + b
        lhs = jnp.concatenate([agg, h], axis=-1)                          # [N, 2*LANE]
        z = jnp.dot(lhs, w_ref[...], preferred_element_type=jnp.float32) + b_ref[...]
        return jnp.maximum(z, 0.0)                                        # fused ReLU

    h = sage_relu(x_ref[...], w1_ref, b1_ref)
    # TODO(synk): the reference's first F.dropout(p=0.3) always runs in training
    # mode (stochastic); dropout is implemented here as eval-mode identity.
    h = sage_relu(h, w2_ref, b2_ref)
    h = sage_relu(h, w3_ref, b3_ref)

    # Root-node readout as a static one-hot selection matmul -> lane-dense store.
    o_ref[...] = jnp.dot(r_ref[...], h, preferred_element_type=jnp.float32)


def shadow_fused(a_mean, x_pad, r_onehot, w1, b1, w2, b2, w3, b3):
    """Single Pallas call; every operand is one full-array VMEM block."""
    n = x_pad.shape[0]
    g = r_onehot.shape[0]

    def full(shape):
        return pl.BlockSpec(shape, lambda i: tuple(0 for _ in shape))

    flops = 3 * (2 * n * n * LANE + 2 * n * (2 * LANE) * LANE) + 2 * g * n * LANE
    bytes_accessed = 4 * (a_mean.size + x_pad.size + r_onehot.size
                          + w1.size + b1.size + w2.size + b2.size
                          + w3.size + b3.size + g * LANE)

    return pl.pallas_call(
        _shadow_fused_kernel,
        out_shape=jax.ShapeDtypeStruct((g, LANE), jnp.float32),
        grid=(1,),
        in_specs=[full(a_mean.shape), full(x_pad.shape), full(r_onehot.shape),
                  full(w1.shape), full(b1.shape),
                  full(w2.shape), full(b2.shape),
                  full(w3.shape), full(b3.shape)],
        out_specs=full((g, LANE)),
        compiler_params=pltpu.CompilerParams(
            dimension_semantics=("arbitrary",)),
        cost_estimate=pl.CostEstimate(flops=flops, transcendentals=0,
                                      bytes_accessed=bytes_accessed),
    )(a_mean, x_pad, r_onehot, w1, b1, w2, b2, w3, b3)


# ------------------------------ glue / model ------------------------------ #
def init_params(key, in_channels, hidden_channels, out_channels):
    ks = jax.random.split(key, 8)

    def lin(k, fan_in, fan_out):
        lim = 1.0 / np.sqrt(fan_in)
        return jax.random.uniform(k, (fan_in, fan_out), jnp.float32, -lim, lim)

    return {
        # SAGEConv1: lin_l (with bias), lin_r (no bias)
        "w_l1": lin(ks[0], in_channels, hidden_channels),
        "w_r1": lin(ks[1], in_channels, hidden_channels),
        "b1": jnp.zeros((1, hidden_channels), jnp.float32),
        # SAGEConv2
        "w_l2": lin(ks[2], hidden_channels, hidden_channels),
        "w_r2": lin(ks[3], hidden_channels, hidden_channels),
        "b2": jnp.zeros((1, hidden_channels), jnp.float32),
        # SAGEConv3
        "w_l3": lin(ks[4], hidden_channels, hidden_channels),
        "w_r3": lin(ks[5], hidden_channels, hidden_channels),
        "b3": jnp.zeros((1, hidden_channels), jnp.float32),
        # self.lin exists in __init__ but is not used in forward(); kept for fidelity.
        "w_lin": lin(ks[6], 2 * hidden_channels, out_channels),
        "b_lin": jnp.zeros((out_channels,), jnp.float32),
    }


def _pad2d(w, rows, cols):
    return jnp.zeros((rows, cols), jnp.float32).at[:w.shape[0], :w.shape[1]].set(w)


def _pack_layer(w_l, w_r, b):
    # Stack [[W_l]; [W_r]] padded to [2*LANE, LANE] so the merged contraction
    # dim is 2*LANE and the output dim is lane-dense; padded entries are zero.
    w = jnp.concatenate([_pad2d(w_l, LANE, LANE), _pad2d(w_r, LANE, LANE)], axis=0)
    return w, _pad2d(b, 1, LANE)


def shadow_forward(params, x, edge_index, batch_idx, num_graphs):
    n, _ = x.shape
    hidden = params["w_l1"].shape[1]
    src, dst = edge_index[0], edge_index[1]

    # Dense mean-aggregation operator (glue; the matmuls run in the kernel).
    a = jnp.zeros((n, n), jnp.float32).at[dst, src].add(1.0)
    deg = a.sum(axis=1, keepdims=True)
    a_mean = jnp.where(deg > 0, a / jnp.maximum(deg, 1.0), 0.0)

    # Zero-pad the feature dim to the lane width once (stays zero through layers).
    x_pad = _pad2d(x, n, LANE)

    w1, b1 = _pack_layer(params["w_l1"], params["w_r1"], params["b1"])
    w2, b2 = _pack_layer(params["w_l2"], params["w_r2"], params["b2"])
    w3, b3 = _pack_layer(params["w_l3"], params["w_r3"], params["b3"])

    # Root-node selection, exactly mirroring the PyTorch diff trick:
    # root_idx = batch_idx; root_idx[1:] -= batch_idx[:-1]; root_idx[0] += 1
    root_val = jnp.concatenate([batch_idx[:1] + 1,
                                batch_idx[1:] - batch_idx[:-1]])
    root_rows = jnp.nonzero(root_val == 1, size=num_graphs)[0]
    r_onehot = jax.nn.one_hot(root_rows, n, dtype=jnp.float32)

    out_pad = shadow_fused(a_mean, x_pad, r_onehot, w1, b1, w2, b2, w3, b3)
    return out_pad[:, :hidden]


# --------------------------------- main ----------------------------------- #
if __name__ == "__main__":
    in_channels, hidden_channels, out_channels = 4, 32, 8

    # 3 subgraphs with 6, 5, 5 nodes -> N = 16 nodes total.
    graph_sizes = [6, 5, 5]
    num_graphs = len(graph_sizes)
    n = sum(graph_sizes)

    # batch assignment vector (sorted, as produced by PyG subgraph batching)
    batch_np = np.concatenate(
        [np.full(sz, g, dtype=np.int32) for g, sz in enumerate(graph_sizes)])

    # deterministic ring edges (both directions) inside each subgraph
    src_list, dst_list = [], []
    offset = 0
    for sz in graph_sizes:
        for k in range(sz):
            u, v = offset + k, offset + (k + 1) % sz
            src_list += [u, v]
            dst_list += [v, u]
        offset += sz
    edge_index_np = np.stack([np.array(src_list, np.int32),
                              np.array(dst_list, np.int32)])

    key = jax.random.PRNGKey(0)
    k_x, k_p = jax.random.split(key)
    x = jax.random.normal(k_x, (n, in_channels), jnp.float32)
    params = init_params(k_p, in_channels, hidden_channels, out_channels)

    edge_index = jnp.asarray(edge_index_np)
    batch_idx = jnp.asarray(batch_np)

    graph_embs = shadow_forward(params, x, edge_index, batch_idx, num_graphs)
    graph_embs = jax.block_until_ready(graph_embs)

    assert graph_embs.shape == (num_graphs, hidden_channels)
    assert graph_embs.dtype == jnp.float32
    assert bool(jnp.all(jnp.isfinite(graph_embs)))
    print("KERNEL_OK")
</pallas_src>

<mosaic_0001>
module attributes {stable_mosaic.version = 11 : i64} {
  func.func @_shadow_fused_kernel(%arg0: i32, %arg1: memref<16x16xf32, #tpu.memory_space<vmem>>, %arg2: memref<16x128xf32, #tpu.memory_space<vmem>>, %arg3: memref<3x16xf32, #tpu.memory_space<vmem>>, %arg4: memref<256x128xf32, #tpu.memory_space<vmem>>, %arg5: memref<1x128xf32, #tpu.memory_space<vmem>>, %arg6: memref<256x128xf32, #tpu.memory_space<vmem>>, %arg7: memref<1x128xf32, #tpu.memory_space<vmem>>, %arg8: memref<256x128xf32, #tpu.memory_space<vmem>>, %arg9: memref<1x128xf32, #tpu.memory_space<vmem>>, %arg10: memref<3x128xf32, #tpu.memory_space<vmem>>) attributes {dimension_semantics = [#tpu.dimension_semantics<arbitrary>], iteration_bounds = array<i64: 1>, scalar_prefetch = 0 : i64, scratch_operands = 0 : i64, tpu.core_type = #tpu.core_type<tc>, window_params = [{pipeline_mode = #tpu.pipeline_mode<synchronous>, transform_indices = @transform_0, window_bounds = array<i64: 16, 16>}, {pipeline_mode = #tpu.pipeline_mode<synchronous>, transform_indices = @transform_1, window_bounds = array<i64: 16, 128>}, {pipeline_mode = #tpu.pipeline_mode<synchronous>, transform_indices = @transform_2, window_bounds = array<i64: 3, 16>}, {pipeline_mode = #tpu.pipeline_mode<synchronous>, transform_indices = @transform_3, window_bounds = array<i64: 256, 128>}, {pipeline_mode = #tpu.pipeline_mode<synchronous>, transform_indices = @transform_4, window_bounds = array<i64: 1, 128>}, {pipeline_mode = #tpu.pipeline_mode<synchronous>, transform_indices = @transform_5, window_bounds = array<i64: 256, 128>}, {pipeline_mode = #tpu.pipeline_mode<synchronous>, transform_indices = @transform_6, window_bounds = array<i64: 1, 128>}, {pipeline_mode = #tpu.pipeline_mode<synchronous>, transform_indices = @transform_7, window_bounds = array<i64: 256, 128>}, {pipeline_mode = #tpu.pipeline_mode<synchronous>, transform_indices = @transform_8, window_bounds = array<i64: 1, 128>}, {pipeline_mode = #tpu.pipeline_mode<synchronous>, transform_indices = @transform_9, window_bounds = array<i64: 3, 128>}]} {
    %c0 = arith.constant 0 : index
    %c0_0 = arith.constant 0 : index
    %0 = vector.load %arg1[%c0, %c0_0] : memref<16x16xf32, #tpu.memory_space<vmem>>, vector<16x16xf32>
    %c0_1 = arith.constant 0 : index
    %c0_2 = arith.constant 0 : index
    %1 = vector.load %arg2[%c0_1, %c0_2] : memref<16x128xf32, #tpu.memory_space<vmem>>, vector<16x128xf32>
    %cst = arith.constant dense<0.000000e+00> : vector<16x128xf32>
    %2 = tpu.matmul %0, %1, %cst {dimension_numbers = #tpu.dot_dimension_numbers<[1], [0], [0], [1], [0, 0, 1, 1], [], []>} : vector<16x16xf32>, vector<16x128xf32>, vector<16x128xf32> -> vector<16x128xf32>
    %3 = tpu.concatenate %2, %1 in 1 : vector<16x128xf32>, vector<16x128xf32> -> vector<16x256xf32>
    %c0_3 = arith.constant 0 : index
    %c0_4 = arith.constant 0 : index
    %4 = vector.load %arg4[%c0_3, %c0_4] : memref<256x128xf32, #tpu.memory_space<vmem>>, vector<256x128xf32>
    %cst_5 = arith.constant dense<0.000000e+00> : vector<16x128xf32>
    %5 = tpu.matmul %3, %4, %cst_5 {dimension_numbers = #tpu.dot_dimension_numbers<[1], [0], [0], [1], [0, 0, 1, 1], [], []>} : vector<16x256xf32>, vector<256x128xf32>, vector<16x128xf32> -> vector<16x128xf32>
    %c0_6 = arith.constant 0 : index
    %c0_7 = arith.constant 0 : index
    %6 = vector.load %arg5[%c0_6, %c0_7] : memref<1x128xf32, #tpu.memory_space<vmem>>, vector<1x128xf32>
    %7 = vector.broadcast %6 : vector<1x128xf32> to vector<16x128xf32>
    %8 = arith.addf %5, %7 : vector<16x128xf32>
    %cst_8 = arith.constant 0.000000e+00 : f32
    %9 = vector.broadcast %cst_8 : f32 to vector<16x128xf32>
    %10 = arith.maximumf %8, %9 : vector<16x128xf32>
    %cst_9 = arith.constant dense<0.000000e+00> : vector<16x128xf32>
    %11 = tpu.matmul %0, %10, %cst_9 {dimension_numbers = #tpu.dot_dimension_numbers<[1], [0], [0], [1], [0, 0, 1, 1], [], []>} : vector<16x16xf32>, vector<16x128xf32>, vector<16x128xf32> -> vector<16x128xf32>
    %12 = tpu.concatenate %11, %10 in 1 : vector<16x128xf32>, vector<16x128xf32> -> vector<16x256xf32>
    %c0_10 = arith.constant 0 : index
    %c0_11 = arith.constant 0 : index
    %13 = vector.load %arg6[%c0_10, %c0_11] : memref<256x128xf32, #tpu.memory_space<vmem>>, vector<256x128xf32>
    %cst_12 = arith.constant dense<0.000000e+00> : vector<16x128xf32>
    %14 = tpu.matmul %12, %13, %cst_12 {dimension_numbers = #tpu.dot_dimension_numbers<[1], [0], [0], [1], [0, 0, 1, 1], [], []>} : vector<16x256xf32>, vector<256x128xf32>, vector<16x128xf32> -> vector<16x128xf32>
    %c0_13 = arith.constant 0 : index
    %c0_14 = arith.constant 0 : index
    %15 = vector.load %arg7[%c0_13, %c0_14] : memref<1x128xf32, #tpu.memory_space<vmem>>, vector<1x128xf32>
    %16 = vector.broadcast %15 : vector<1x128xf32> to vector<16x128xf32>
    %17 = arith.addf %14, %16 : vector<16x128xf32>
    %cst_15 = arith.constant 0.000000e+00 : f32
    %18 = vector.broadcast %cst_15 : f32 to vector<16x128xf32>
    %19 = arith.maximumf %17, %18 : vector<16x128xf32>
    %cst_16 = arith.constant dense<0.000000e+00> : vector<16x128xf32>
    %20 = tpu.matmul %0, %19, %cst_16 {dimension_numbers = #tpu.dot_dimension_numbers<[1], [0], [0], [1], [0, 0, 1, 1], [], []>} : vector<16x16xf32>, vector<16x128xf32>, vector<16x128xf32> -> vector<16x128xf32>
    %21 = tpu.concatenate %20, %19 in 1 : vector<16x128xf32>, vector<16x128xf32> -> vector<16x256xf32>
    %c0_17 = arith.constant 0 : index
    %c0_18 = arith.constant 0 : index
    %22 = vector.load %arg8[%c0_17, %c0_18] : memref<256x128xf32, #tpu.memory_space<vmem>>, vector<256x128xf32>
    %cst_19 = arith.constant dense<0.000000e+00> : vector<16x128xf32>
    %23 = tpu.matmul %21, %22, %cst_19 {dimension_numbers = #tpu.dot_dimension_numbers<[1], [0], [0], [1], [0, 0, 1, 1], [], []>} : vector<16x256xf32>, vector<256x128xf32>, vector<16x128xf32> -> vector<16x128xf32>
    %c0_20 = arith.constant 0 : index
    %c0_21 = arith.constant 0 : index
    %24 = vector.load %arg9[%c0_20, %c0_21] : memref<1x128xf32, #tpu.memory_space<vmem>>, vector<1x128xf32>
    %25 = vector.broadcast %24 : vector<1x128xf32> to vector<16x128xf32>
    %26 = arith.addf %23, %25 : vector<16x128xf32>
    %cst_22 = arith.constant 0.000000e+00 : f32
    %27 = vector.broadcast %cst_22 : f32 to vector<16x128xf32>
    %28 = arith.maximumf %26, %27 : vector<16x128xf32>
    %c0_23 = arith.constant 0 : index
    %c0_24 = arith.constant 0 : index
    %29 = vector.load %arg3[%c0_23, %c0_24] : memref<3x16xf32, #tpu.memory_space<vmem>>, vector<3x16xf32>
    %cst_25 = arith.constant dense<0.000000e+00> : vector<3x128xf32>
    %30 = tpu.matmul %29, %28, %cst_25 {dimension_numbers = #tpu.dot_dimension_numbers<[1], [0], [0], [1], [0, 0, 1, 1], [], []>} : vector<3x16xf32>, vector<16x128xf32>, vector<3x128xf32> -> vector<3x128xf32>
    %c0_26 = arith.constant 0 : index
    %c0_27 = arith.constant 0 : index
    %31 = vector.load %arg10[%c0_26, %c0_27] : memref<3x128xf32, #tpu.memory_space<vmem>>, vector<3x128xf32>
    tpu.vector_store %arg10[%c0_26, %c0_27], %30 {strides = array<i32>} : memref<3x128xf32, #tpu.memory_space<vmem>>, vector<3x128xf32>,
    return
  }
  func.func @transform_0(%arg0: i32) -> (i32, i32) {
    %c0_i32 = arith.constant 0 : i32
    %c0_i32_0 = arith.constant 0 : i32
    %c0_i32_1 = arith.constant 0 : i32
    return %c0_i32, %c0_i32_0 : i32, i32
  }
  func.func @transform_1(%arg0: i32) -> (i32, i32) {
    %c0_i32 = arith.constant 0 : i32
    %c0_i32_0 = arith.constant 0 : i32
    %c0_i32_1 = arith.constant 0 : i32
    return %c0_i32, %c0_i32_0 : i32, i32
  }
  func.func @transform_2(%arg0: i32) -> (i32, i32) {
    %c0_i32 = arith.constant 0 : i32
    %c0_i32_0 = arith.constant 0 : i32
    %c0_i32_1 = arith.constant 0 : i32
    return %c0_i32, %c0_i32_0 : i32, i32
  }
  func.func @transform_3(%arg0: i32) -> (i32, i32) {
    %c0_i32 = arith.constant 0 : i32
    %c0_i32_0 = arith.constant 0 : i32
    %c0_i32_1 = arith.constant 0 : i32
    return %c0_i32, %c0_i32_0 : i32, i32
  }
  func.func @transform_4(%arg0: i32) -> (i32, i32) {
    %c0_i32 = arith.constant 0 : i32
    %c0_i32_0 = arith.constant 0 : i32
    %c0_i32_1 = arith.constant 0 : i32
    return %c0_i32, %c0_i32_0 : i32, i32
  }
  func.func @transform_5(%arg0: i32) -> (i32, i32) {
    %c0_i32 = arith.constant 0 : i32
    %c0_i32_0 = arith.constant 0 : i32
    %c0_i32_1 = arith.constant 0 : i32
    return %c0_i32, %c0_i32_0 : i32, i32
  }
  func.func @transform_6(%arg0: i32) -> (i32, i32) {
    %c0_i32 = arith.constant 0 : i32
    %c0_i32_0 = arith.constant 0 : i32
    %c0_i32_1 = arith.constant 0 : i32
    return %c0_i32, %c0_i32_0 : i32, i32
  }
  func.func @transform_7(%arg0: i32) -> (i32, i32) {
    %c0_i32 = arith.constant 0 : i32
    %c0_i32_0 = arith.constant 0 : i32
    %c0_i32_1 = arith.constant 0 : i32
    return %c0_i32, %c0_i32_0 : i32, i32
  }
  func.func @transform_8(%arg0: i32) -> (i32, i32) {
    %c0_i32 = arith.constant 0 : i32
    %c0_i32_0 = arith.constant 0 : i32
    %c0_i32_1 = arith.constant 0 : i32
    return %c0_i32, %c0_i32_0 : i32, i32
  }
  func.func @transform_9(%arg0: i32) -> (i32, i32) {
    %c0_i32 = arith.constant 0 : i32
    %c0_i32_0 = arith.constant 0 : i32
    %c0_i32_1 = arith.constant 0 : i32
    return %c0_i32, %c0_i32_0 : i32, i32
  }
}

</mosaic_0001>

<llo_original>
// kernel: tpu_custom_call.1
$region0: #{tpu_custom_call.1}
  #allocation0 [shape = 'u32[]', space=smem, size = 0x4, offset = 0x4, fixed_abs, tag = 'smem constant byte address 0x4 - core index']
  #allocation1 [shape = 'u32[72,128]{1,0:T(1,128)}', space=vmem, size = 0x9000, scoped, tag = 'internal scratch']
  %s0 = inlined_call_operand.hbm [shape: f32[16,16], index: 0, kind: input, shape index: {}]
  %s1 = inlined_call_operand.hbm [shape: f32[16,128], index: 1, kind: input, shape index: {}]
  %s2 = inlined_call_operand.hbm [shape: f32[3,16], index: 2, kind: input, shape index: {}]
  %s3 = inlined_call_operand.hbm [shape: f32[256,128], index: 3, kind: input, shape index: {}]
  %s4 = inlined_call_operand.vmem [shape: f32[1,128], index: 4, kind: input, shape index: {}]
  %s5 = inlined_call_operand.hbm [shape: f32[256,128], index: 5, kind: input, shape index: {}]
  %s6 = inlined_call_operand.vmem [shape: f32[1,128], index: 6, kind: input, shape index: {}]
  %s7 = inlined_call_operand.hbm [shape: f32[256,128], index: 7, kind: input, shape index: {}]
  %s8 = inlined_call_operand.vmem [shape: f32[1,128], index: 8, kind: input, shape index: {}]
  %s9 = inlined_call_operand.hbm [shape: f32[3,128], index: 9, kind: output, shape index: {}]
  %s10 = sld [smem:[#allocation0]]
  $region70: #{tpu_custom_call.1} parent=0
    _
  %s12 = ssub.s32 1, %s10
  %s13 = scalar_select 0, %s12, %s10
  $region1: #{tpu_custom_call.1} parent=0
    #allocation2 [shape = 'u8[8192]{0}', space=vmem, size = 0x2000, scoped, tag = 'input window, operand 0, single buffered']
    #allocation3 [shape = 's32[1]{0}', space=sflag, size = 0x4, scoped, tag = 'scoped memory for tpu_custom_call.1']
    #allocation4 [shape = 's32[1]{0}', space=sflag, size = 0x4, scoped, tag = 'scoped memory for tpu_custom_call.1']
    #allocation5 [shape = 'u8[8192]{0}', space=vmem, size = 0x2000, scoped, tag = 'input window, operand 1, single buffered']
    #allocation6 [shape = 's32[1]{0}', space=sflag, size = 0x4, scoped, tag = 'scoped memory for tpu_custom_call.1']
    #allocation7 [shape = 'u8[2048]{0}', space=vmem, size = 0x800, scoped, tag = 'input window, operand 2, single buffered']
    #allocation8 [shape = 'u8[131072]{0}', space=vmem, size = 0x20000, scoped, tag = 'input window, operand 3, single buffered']
    #allocation9 [shape = 's32[1]{0}', space=sflag, size = 0x4, scoped, tag = 'scoped memory for tpu_custom_call.1']
    #allocation10 [shape = 'u8[131072]{0}', space=vmem, size = 0x20000, scoped, tag = 'input window, operand 5, single buffered']
    #allocation11 [shape = 'u8[131072]{0}', space=vmem, size = 0x20000, scoped, tag = 'input window, operand 7, single buffered']
    #allocation12 [shape = 's32[1]{0}', space=sflag, size = 0x4, scoped, tag = 'scoped memory for tpu_custom_call.1']
    #allocation13 [shape = 'u8[2048]{0}', space=vmem, size = 0x800, scoped, tag = 'output window, operand 0, single buffered']
    %14 = vsyncpa [#allocation3], 0
    %15 = vsyncpa [#allocation6], 0
    %16 = vsyncpa [#allocation9], 0
    %17 = vsyncpa [#allocation12], 0
    %18 = vsyncpa [#allocation4], 0
    // Predicated region
    $region2: #{tpu_custom_call.1} parent=1 // pred_check
      _
    $region3: #{tpu_custom_call.1} parent=1 // pred_check_branch
      %20 = sbr.rel (0) target = $region5
    $region4: #{tpu_custom_call.1} parent=1 // pred_region
      %22 = vsyncadd [#allocation3], 0
      %s23 = sshll.u32 %s0, 4
      %s24 = int_to_ptr.hbm [resolvable:$true] %s23
      %s25 = sshll.u32 [#allocation2], 4
      %s26 = int_to_ptr.vmem [resolvable:$true] %s25
      %31 = dma.hbm_to_vmem [thread:$0]  %s24, 256, %s26, [#allocation3], 128, 128, 8
    $region5: #{tpu_custom_call.1} parent=1 // pred_fallthru
      _
    // Predicated region
    $region6: #{tpu_custom_call.1} parent=1 // pred_check
      _
    $region7: #{tpu_custom_call.1} parent=1 // pred_check_branch
      %33 = sbr.rel (0) target = $region9
    $region8: #{tpu_custom_call.1} parent=1 // pred_region
      %35 = vsyncadd [#allocation6], 0
      %s36 = sshll.u32 %s1, 4
      %s37 = int_to_ptr.hbm [resolvable:$true] %s36
      %s38 = sshll.u32 [#allocation5], 4
      %s39 = int_to_ptr.vmem [resolvable:$true] %s38
      %44 = dma.hbm_to_vmem [thread:$0]  %s37, 256, %s39, [#allocation6], 128, 128, 8
    $region9: #{tpu_custom_call.1} parent=1 // pred_fallthru
      _
    // Predicated region
    $region10: #{tpu_custom_call.1} parent=1 // pred_check
      _
    $region11: #{tpu_custom_call.1} parent=1 // pred_check_branch
      %46 = sbr.rel (0) target = $region13
    $region12: #{tpu_custom_call.1} parent=1 // pred_region
      %48 = vsyncadd [#allocation6], 0
      %s50 = sshll.u32 %s2, 4
      %s51 = int_to_ptr.hbm [resolvable:$true] %s50
      %s52 = sshll.u32 [#allocation7], 4
      %s53 = int_to_ptr.vmem [resolvable:$true] %s52
      %55 = dma.hbm_to_vmem [thread:$0]  %s51, 64, %s53, [#allocation6]
    $region13: #{tpu_custom_call.1} parent=1 // pred_fallthru
      _
    // Predicated region
    $region14: #{tpu_custom_call.1} parent=1 // pred_check
      _
    $region15: #{tpu_custom_call.1} parent=1 // pred_check_branch
      %57 = sbr.rel (0) target = $region17
    $region16: #{tpu_custom_call.1} parent=1 // pred_region
      %59 = vsyncadd [#allocation9], 0
      %s60 = sshll.u32 %s3, 4
      %s61 = int_to_ptr.hbm [resolvable:$true] %s60
      %s62 = sshll.u32 [#allocation8], 4
      %s63 = int_to_ptr.vmem [resolvable:$true] %s62
      %68 = dma.hbm_to_vmem [thread:$0]  %s61, 4096, %s63, [#allocation9], 128, 128, 8
    $region17: #{tpu_custom_call.1} parent=1 // pred_fallthru
      _
    // Predicated region
    $region18: #{tpu_custom_call.1} parent=1 // pred_check
      _
    $region19: #{tpu_custom_call.1} parent=1 // pred_check_branch
      %70 = sbr.rel (0) target = $region21
    $region20: #{tpu_custom_call.1} parent=1 // pred_region
      _
    $region21: #{tpu_custom_call.1} parent=1 // pred_fallthru
      _
    // Predicated region
    $region22: #{tpu_custom_call.1} parent=1 // pred_check
      _
    $region23: #{tpu_custom_call.1} parent=1 // pred_check_branch
      %72 = sbr.rel (0) target = $region25
    $region24: #{tpu_custom_call.1} parent=1 // pred_region
      %74 = vsyncadd [#allocation9], 0
      %s75 = sshll.u32 %s5, 4
      %s76 = int_to_ptr.hbm [resolvable:$true] %s75
      %s77 = sshll.u32 [#allocation10], 4
      %s78 = int_to_ptr.vmem [resolvable:$true] %s77
      %83 = dma.hbm_to_vmem [thread:$0]  %s76, 4096, %s78, [#allocation9], 128, 128, 8
    $region25: #{tpu_custom_call.1} parent=1 // pred_fallthru
      _
    // Predicated region
    $region26: #{tpu_custom_call.1} parent=1 // pred_check
      _
    $region27: #{tpu_custom_call.1} parent=1 // pred_check_branch
      %85 = sbr.rel (0) target = $region29
    $region28: #{tpu_custom_call.1} parent=1 // pred_region
      _
    $region29: #{tpu_custom_call.1} parent=1 // pred_fallthru
      _
    // Predicated region
    $region30: #{tpu_custom_call.1} parent=1 // pred_check
      _
    $region31: #{tpu_custom_call.1} parent=1 // pred_check_branch
      %87 = sbr.rel (0) target = $region33
    $region32: #{tpu_custom_call.1} parent=1 // pred_region
      %89 = vsyncadd [#allocation12], 0
      %s90 = sshll.u32 %s7, 4
      %s91 = int_to_ptr.hbm [resolvable:$true] %s90
      %s92 = sshll.u32 [#allocation11], 4
      %s93 = int_to_ptr.vmem [resolvable:$true] %s92
      %98 = dma.hbm_to_vmem [thread:$0]  %s91, 4096, %s93, [#allocation12], 128, 128, 8
    $region33: #{tpu_custom_call.1} parent=1 // pred_fallthru
      _
    // Predicated region
    $region34: #{tpu_custom_call.1} parent=1 // pred_check
      _
    $region35: #{tpu_custom_call.1} parent=1 // pred_check_branch
      %100 = sbr.rel (0) target = $region37
    $region36: #{tpu_custom_call.1} parent=1 // pred_region
      _
    $region37: #{tpu_custom_call.1} parent=1 // pred_fallthru
      _
    // Predicated region
    $region38: #{tpu_custom_call.1} parent=1 // pred_check
      _
    $region39: #{tpu_custom_call.1} parent=1 // pred_check_branch
      %102 = sbr.rel (0) target = $region41
    $region40: #{tpu_custom_call.1} parent=1 // pred_region
      %104 = dma.done [#allocation3], 256
    $region41: #{tpu_custom_call.1} parent=1 // pred_fallthru
      _
    // Predicated region
    $region42: #{tpu_custom_call.1} parent=1 // pred_check
      _
    $region43: #{tpu_custom_call.1} parent=1 // pred_check_branch
      %106 = sbr.rel (0) target = $region45
    $region44: #{tpu_custom_call.1} parent=1 // pred_region
      %108 = dma.done [#allocation6], 256
    $region45: #{tpu_custom_call.1} parent=1 // pred_fallthru
      _
    // Predicated region
    $region46: #{tpu_custom_call.1} parent=1 // pred_check
      _
    $region47: #{tpu_custom_call.1} parent=1 // pred_check_branch
      %110 = sbr.rel (0) target = $region49
    $region48: #{tpu_custom_call.1} parent=1 // pred_region
      %112 = dma.done [#allocation6], 64
    $region49: #{tpu_custom_call.1} parent=1 // pred_fallthru
      _
    // Predicated region
    $region50: #{tpu_custom_call.1} parent=1 // pred_check
      _
    $region51: #{tpu_custom_call.1} parent=1 // pred_check_branch
      %114 = sbr.rel (0) target = $region53
    $region52: #{tpu_custom_call.1} parent=1 // pred_region
      %116 = dma.done [#allocation9], 4096
    $region53: #{tpu_custom_call.1} parent=1 // pred_fallthru
      _
    // Predicated region
    $region54: #{tpu_custom_call.1} parent=1 // pred_check
      _
    $region55: #{tpu_custom_call.1} parent=1 // pred_check_branch
      %118 = sbr.rel (0) target = $region57
    $region56: #{tpu_custom_call.1} parent=1 // pred_region
      %120 = dma.done [#allocation9], 4096
    $region57: #{tpu_custom_call.1} parent=1 // pred_fallthru
      _
    // Predicated region
    $region58: #{tpu_custom_call.1} parent=1 // pred_check
      _
    $region59: #{tpu_custom_call.1} parent=1 // pred_check_branch
      %122 = sbr.rel (0) target = $region61
    $region60: #{tpu_custom_call.1} parent=1 // pred_region
      %124 = dma.done [#allocation12], 4096
    $region61: #{tpu_custom_call.1} parent=1 // pred_fallthru
      _
    %v125 = vld [vmem:[#allocation2] sm:$0xff]
    %v126 = vld [vmem:[#allocation2 + $0x8] sm:$0xff]
    %v127 = vld [vmem:[#allocation5] sm:$0xff]
    %v128 = vld [vmem:[#allocation5 + $0x8] sm:$0xff]
    %vm129 = vcmask 130048
    %v131 = vsel %vm129, %v125, 0
    %v134 = vsel %vm129, %v126, 0
    %136 = vmatpush.msra.mxu0 0.0
    %137 = vmatpush.msra.mxu0 0.0
    %138 = vmatpush.msra.mxu0 0.0
    %139 = vmatpush.msra.mxu0 0.0
    %140 = vmatpush.msra.mxu0 0.0
    %141 = vmatpush.msra.mxu0 0.0
    %142 = vmatpush.msra.mxu0 0.0
    %143 = vmatpush.msra.mxu0 0.0
    %144 = vmatpush.msra.mxu0 0.0
    %145 = vmatpush.msra.mxu0 0.0
    %146 = vmatpush.msra.mxu0 0.0
    %147 = vmatpush.msra.mxu0 0.0
    %148 = vmatpush.msra.mxu0 0.0
    %149 = vmatpush.msra.mxu0 0.0
    %150 = vmatpush.msra.mxu0 %v128
    %151 = vmatpush.msra.mxu0 %v127
    %152 = vmatmul.f32.gmra.mxu0 %v131
    %v153 = vpop.f32.mrf.mxu0
    %v154 = vadd.f32 0.0, %v153
    %155 = vmatmul.f32.gmra.mxu0 %v134
    %v156 = vpop.f32.mrf.mxu0
    %v157 = vadd.f32 0.0, %v156
    %158 = vdwg.mxu0
    %v159 = vld [vmem:[#allocation8] sm:$0xff]
    %v160 = vld [vmem:[#allocation8 + $0x8] sm:$0xff]
    %v161 = vld [vmem:[#allocation8 + $0x10] sm:$0xff]
    %v162 = vld [vmem:[#allocation8 + $0x18] sm:$0xff]
    %v163 = vld [vmem:[#allocation8 + $0x20] sm:$0xff]
    %v164 = vld [vmem:[#allocation8 + $0x28] sm:$0xff]
    %v165 = vld [vmem:[#allocation8 + $0x30] sm:$0xff]
    %v166 = vld [vmem:[#allocation8 + $0x38] sm:$0xff]
    %v167 = vld [vmem:[#allocation8 + $0x40] sm:$0xff]
    %v168 = vld [vmem:[#allocation8 + $0x48] sm:$0xff]
    %v169 = vld [vmem:[#allocation8 + $0x50] sm:$0xff]
    %v170 = vld [vmem:[#allocation8 + $0x58] sm:$0xff]
    %v171 = vld [vmem:[#allocation8 + $0x60] sm:$0xff]
    %v172 = vld [vmem:[#allocation8 + $0x68] sm:$0xff]
    %v173 = vld [vmem:[#allocation8 + $0x70] sm:$0xff]
    %v174 = vld [vmem:[#allocation8 + $0x78] sm:$0xff]
    %v175 = vld [vmem:[#allocation8 + $0x80] sm:$0xff]
    %v176 = vld [vmem:[#allocation8 + $0x88] sm:$0xff]
    %v177 = vld [vmem:[#allocation8 + $0x90] sm:$0xff]
    %v178 = vld [vmem:[#allocation8 + $0x98] sm:$0xff]
    %v179 = vld [vmem:[#allocation8 + $0xa0] sm:$0xff]
    %v180 = vld [vmem:[#allocation8 + $0xa8] sm:$0xff]
    %v181 = vld [vmem:[#allocation8 + $0xb0] sm:$0xff]
    %v182 = vld [vmem:[#allocation8 + $0xb8] sm:$0xff]
    %v183 = vld [vmem:[#allocation8 + $0xc0] sm:$0xff]
    %v184 = vld [vmem:[#allocation8 + $0xc8] sm:$0xff]
    %v185 = vld [vmem:[#allocation8 + $0xd0] sm:$0xff]
    %v186 = vld [vmem:[#allocation8 + $0xd8] sm:$0xff]
    %v187 = vld [vmem:[#allocation8 + $0xe0] sm:$0xff]
    %v188 = vld [vmem:[#allocation8 + $0xe8] sm:$0xff]
    %v189 = vld [vmem:[#allocation8 + $0xf0] sm:$0xff]
    %v190 = vld [vmem:[#allocation8 + $0xf8] sm:$0xff]
    %v191 = vld [vmem:[%s4] sm:$0x1]
    %v193 = vperm.slane %v191, 0
    %195 = vmatpush.msra.mxu0 %v174
    %196 = vmatpush.msra.mxu0 %v173
    %197 = vmatpush.msra.mxu0 %v172
    %198 = vmatpush.msra.mxu0 %v171
    %199 = vmatpush.msra.mxu0 %v170
    %200 = vmatpush.msra.mxu0 %v169
    %201 = vmatpush.msra.mxu0 %v168
    %202 = vmatpush.msra.mxu0 %v167
    %203 = vmatpush.msra.mxu0 %v166
    %204 = vmatpush.msra.mxu0 %v165
    %205 = vmatpush.msra.mxu0 %v164
    %206 = vmatpush.msra.mxu0 %v163
    %207 = vmatpush.msra.mxu0 %v162
    %208 = vmatpush.msra.mxu0 %v161
    %209 = vmatpush.msra.mxu0 %v160
    %210 = vmatpush.msra.mxu0 %v159
    %211 = vmatmul.f32.gmra.mxu0 %v154
    %v212 = vpop.f32.mrf.mxu0
    %v213 = vadd.f32 %v193, %v212
    %214 = vmatmul.f32.gmra.mxu0 %v157
    %v215 = vpop.f32.mrf.mxu0
    %v216 = vadd.f32 %v193, %v215
    %217 = vdwg.mxu0
    %218 = vmatpush.msra.mxu0 %v190
    %219 = vmatpush.msra.mxu0 %v189
    %220 = vmatpush.msra.mxu0 %v188
    %221 = vmatpush.msra.mxu0 %v187
    %222 = vmatpush.msra.mxu0 %v186
    %223 = vmatpush.msra.mxu0 %v185
    %224 = vmatpush.msra.mxu0 %v184
    %225 = vmatpush.msra.mxu0 %v183
    %226 = vmatpush.msra.mxu0 %v182
    %227 = vmatpush.msra.mxu0 %v181
    %228 = vmatpush.msra.mxu0 %v180
    %229 = vmatpush.msra.mxu0 %v179
    %230 = vmatpush.msra.mxu0 %v178
    %231 = vmatpush.msra.mxu0 %v177
    %232 = vmatpush.msra.mxu0 %v176
    %233 = vmatpush.msra.mxu0 %v175
    %234 = vmatmul.f32.gmra.mxu0 %v127
    %v235 = vpop.f32.mrf.mxu0
    %v236 = vadd.f32 %v213, %v235
    %237 = vmatmul.f32.gmra.mxu0 %v128
    %v238 = vpop.f32.mrf.mxu0
    %v239 = vadd.f32 %v216, %v238
    %240 = vdwg.mxu0
    %v241 = vmax.f32 %v236, 0.0
    %v242 = vmax.f32 %v239, 0.0
    %243 = vmatpush.msra.mxu0 0.0
    %244 = vmatpush.msra.mxu0 0.0
    %245 = vmatpush.msra.mxu0 0.0
    %246 = vmatpush.msra.mxu0 0.0
    %247 = vmatpush.msra.mxu0 0.0
    %248 = vmatpush.msra.mxu0 0.0
    %249 = vmatpush.msra.mxu0 0.0
    %250 = vmatpush.msra.mxu0 0.0
    %251 = vmatpush.msra.mxu0 0.0
    %252 = vmatpush.msra.mxu0 0.0
    %253 = vmatpush.msra.mxu0 0.0
    %254 = vmatpush.msra.mxu0 0.0
    %255 = vmatpush.msra.mxu0 0.0
    %256 = vmatpush.msra.mxu0 0.0
    %257 = vmatpush.msra.mxu0 %v242
    %258 = vmatpush.msra.mxu0 %v241
    %259 = vmatmul.f32.gmra.mxu0 %v131
    %v260 = vpop.f32.mrf.mxu0
    %v261 = vadd.f32 0.0, %v260
    %262 = vmatmul.f32.gmra.mxu0 %v134
    %v263 = vpop.f32.mrf.mxu0
    %v264 = vadd.f32 0.0, %v263
    %265 = vdwg.mxu0
    %v266 = vld [vmem:[#allocation10] sm:$0xff]
    %v267 = vld [vmem:[#allocation10 + $0x8] sm:$0xff]
    %v268 = vld [vmem:[#allocation10 + $0x10] sm:$0xff]
    %v269 = vld [vmem:[#allocation10 + $0x18] sm:$0xff]
    %v270 = vld [vmem:[#allocation10 + $0x20] sm:$0xff]
    %v271 = vld [vmem:[#allocation10 + $0x28] sm:$0xff]
    %v272 = vld [vmem:[#allocation10 + $0x30] sm:$0xff]
    %v273 = vld [vmem:[#allocation10 + $0x38] sm:$0xff]
    %v274 = vld [vmem:[#allocation10 + $0x40] sm:$0xff]
    %v275 = vld [vmem:[#allocation10 + $0x48] sm:$0xff]
    %v276 = vld [vmem:[#allocation10 + $0x50] sm:$0xff]
    %v277 = vld [vmem:[#allocation10 + $0x58] sm:$0xff]
    %v278 = vld [vmem:[#allocation10 + $0x60] sm:$0xff]
    %v279 = vld [vmem:[#allocation10 + $0x68] sm:$0xff]
    %v280 = vld [vmem:[#allocation10 + $0x70] sm:$0xff]
    %v281 = vld [vmem:[#allocation10 + $0x78] sm:$0xff]
    %v282 = vld [vmem:[#allocation10 + $0x80] sm:$0xff]
    %v283 = vld [vmem:[#allocation10 + $0x88] sm:$0xff]
    %v284 = vld [vmem:[#allocation10 + $0x90] sm:$0xff]
    %v285 = vld [vmem:[#allocation10 + $0x98] sm:$0xff]
    %v286 = vld [vmem:[#allocation10 + $0xa0] sm:$0xff]
    %v287 = vld [vmem:[#allocation10 + $0xa8] sm:$0xff]
    %v288 = vld [vmem:[#allocation10 + $0xb0] sm:$0xff]
    %v289 = vld [vmem:[#allocation10 + $0xb8] sm:$0xff]
    %v290 = vld [vmem:[#allocation10 + $0xc0] sm:$0xff]
    %v291 = vld [vmem:[#allocation10 + $0xc8] sm:$0xff]
    %v292 = vld [vmem:[#allocation10 + $0xd0] sm:$0xff]
    %v293 = vld [vmem:[#allocation10 + $0xd8] sm:$0xff]
    %v294 = vld [vmem:[#allocation10 + $0xe0] sm:$0xff]
    %v295 = vld [vmem:[#allocation10 + $0xe8] sm:$0xff]
    %v296 = vld [vmem:[#allocation10 + $0xf0] sm:$0xff]
    %v297 = vld [vmem:[#allocation10 + $0xf8] sm:$0xff]
    %v298 = vld [vmem:[%s6] sm:$0x1]
    %v300 = vperm.slane %v298, 0
    %302 = vmatpush.msra.mxu0 %v281
    %303 = vmatpush.msra.mxu0 %v280
    %304 = vmatpush.msra.mxu0 %v279
    %305 = vmatpush.msra.mxu0 %v278
    %306 = vmatpush.msra.mxu0 %v277
    %307 = vmatpush.msra.mxu0 %v276
    %308 = vmatpush.msra.mxu0 %v275
    %309 = vmatpush.msra.mxu0 %v274
    %310 = vmatpush.msra.mxu0 %v273
    %311 = vmatpush.msra.mxu0 %v272
    %312 = vmatpush.msra.mxu0 %v271
    %313 = vmatpush.msra.mxu0 %v270
    %314 = vmatpush.msra.mxu0 %v269
    %315 = vmatpush.msra.mxu0 %v268
    %316 = vmatpush.msra.mxu0 %v267
    %317 = vmatpush.msra.mxu0 %v266
    %318 = vmatmul.f32.gmra.mxu0 %v261
    %v319 = vpop.f32.mrf.mxu0
    %v320 = vadd.f32 %v300, %v319
    %321 = vmatmul.f32.gmra.mxu0 %v264
    %v322 = vpop.f32.mrf.mxu0
    %v323 = vadd.f32 %v300, %v322
    %324 = vdwg.mxu0
    %325 = vmatpush.msra.mxu0 %v297
    %326 = vmatpush.msra.mxu0 %v296
    %327 = vmatpush.msra.mxu0 %v295
    %328 = vmatpush.msra.mxu0 %v294
    %329 = vmatpush.msra.mxu0 %v293
    %330 = vmatpush.msra.mxu0 %v292
    %331 = vmatpush.msra.mxu0 %v291
    %332 = vmatpush.msra.mxu0 %v290
    %333 = vmatpush.msra.mxu0 %v289
    %334 = vmatpush.msra.mxu0 %v288
    %335 = vmatpush.msra.mxu0 %v287
    %336 = vmatpush.msra.mxu0 %v286
    %337 = vmatpush.msra.mxu0 %v285
    %338 = vmatpush.msra.mxu0 %v284
    %339 = vmatpush.msra.mxu0 %v283
    %340 = vmatpush.msra.mxu0 %v282
    %341 = vmatmul.f32.gmra.mxu0 %v241
    %v342 = vpop.f32.mrf.mxu0
    %v343 = vadd.f32 %v320, %v342
    %344 = vmatmul.f32.gmra.mxu0 %v242
    %v345 = vpop.f32.mrf.mxu0
    %v346 = vadd.f32 %v323, %v345
    %347 = vdwg.mxu0
    %v348 = vmax.f32 %v343, 0.0
    %v349 = vmax.f32 %v346, 0.0
    %350 = vmatpush.msra.mxu0 0.0
    %351 = vmatpush.msra.mxu0 0.0
    %352 = vmatpush.msra.mxu0 0.0
    %353 = vmatpush.msra.mxu0 0.0
    %354 = vmatpush.msra.mxu0 0.0
    %355 = vmatpush.msra.mxu0 0.0
    %356 = vmatpush.msra.mxu0 0.0
    %357 = vmatpush.msra.mxu0 0.0
    %358 = vmatpush.msra.mxu0 0.0
    %359 = vmatpush.msra.mxu0 0.0
    %360 = vmatpush.msra.mxu0 0.0
    %361 = vmatpush.msra.mxu0 0.0
    %362 = vmatpush.msra.mxu0 0.0
    %363 = vmatpush.msra.mxu0 0.0
    %364 = vmatpush.msra.mxu0 %v349
    %365 = vmatpush.msra.mxu0 %v348
    %366 = vmatmul.f32.gmra.mxu0 %v131
    %v367 = vpop.f32.mrf.mxu0
    %v368 = vadd.f32 0.0, %v367
    %369 = vmatmul.f32.gmra.mxu0 %v134
    %v370 = vpop.f32.mrf.mxu0
    %v371 = vadd.f32 0.0, %v370
    %372 = vdwg.mxu0
    %v373 = vld [vmem:[#allocation11] sm:$0xff]
    %v374 = vld [vmem:[#allocation11 + $0x8] sm:$0xff]
    %v375 = vld [vmem:[#allocation11 + $0x10] sm:$0xff]
    %v376 = vld [vmem:[#allocation11 + $0x18] sm:$0xff]
    %v377 = vld [vmem:[#allocation11 + $0x20] sm:$0xff]
    %v378 = vld [vmem:[#allocation11 + $0x28] sm:$0xff]
    %v379 = vld [vmem:[#allocation11 + $0x30] sm:$0xff]
    %v380 = vld [vmem:[#allocation11 + $0x38] sm:$0xff]
    %v381 = vld [vmem:[#allocation11 + $0x40] sm:$0xff]
    %v382 = vld [vmem:[#allocation11 + $0x48] sm:$0xff]
    %v383 = vld [vmem:[#allocation11 + $0x50] sm:$0xff]
    %v384 = vld [vmem:[#allocation11 + $0x58] sm:$0xff]
    %v385 = vld [vmem:[#allocation11 + $0x60] sm:$0xff]
    %v386 = vld [vmem:[#allocation11 + $0x68] sm:$0xff]
    %v387 = vld [vmem:[#allocation11 + $0x70] sm:$0xff]
    %v388 = vld [vmem:[#allocation11 + $0x78] sm:$0xff]
    %v389 = vld [vmem:[#allocation11 + $0x80] sm:$0xff]
    %v390 = vld [vmem:[#allocation11 + $0x88] sm:$0xff]
    %v391 = vld [vmem:[#allocation11 + $0x90] sm:$0xff]
    %v392 = vld [vmem:[#allocation11 + $0x98] sm:$0xff]
    %v393 = vld [vmem:[#allocation11 + $0xa0] sm:$0xff]
    %v394 = vld [vmem:[#allocation11 + $0xa8] sm:$0xff]
    %v395 = vld [vmem:[#allocation11 + $0xb0] sm:$0xff]
    %v396 = vld [vmem:[#allocation11 + $0xb8] sm:$0xff]
    %v397 = vld [vmem:[#allocation11 + $0xc0] sm:$0xff]
    %v398 = vld [vmem:[#allocation11 + $0xc8] sm:$0xff]
    %v399 = vld [vmem:[#allocation11 + $0xd0] sm:$0xff]
    %v400 = vld [vmem:[#allocation11 + $0xd8] sm:$0xff]
    %v401 = vld [vmem:[#allocation11 + $0xe0] sm:$0xff]
    %v402 = vld [vmem:[#allocation11 + $0xe8] sm:$0xff]
    %v403 = vld [vmem:[#allocation11 + $0xf0] sm:$0xff]
    %v404 = vld [vmem:[#allocation11 + $0xf8] sm:$0xff]
    %v405 = vld [vmem:[%s8] sm:$0x1]
    %v407 = vperm.slane %v405, 0
    %409 = vmatpush.msra.mxu0 %v388
    %410 = vmatpush.msra.mxu0 %v387
    %411 = vmatpush.msra.mxu0 %v386
    %412 = vmatpush.msra.mxu0 %v385
    %413 = vmatpush.msra.mxu0 %v384
    %414 = vmatpush.msra.mxu0 %v383
    %415 = vmatpush.msra.mxu0 %v382
    %416 = vmatpush.msra.mxu0 %v381
    %417 = vmatpush.msra.mxu0 %v380
    %418 = vmatpush.msra.mxu0 %v379
    %419 = vmatpush.msra.mxu0 %v378
    %420 = vmatpush.msra.mxu0 %v377
    %421 = vmatpush.msra.mxu0 %v376
    %422 = vmatpush.msra.mxu0 %v375
    %423 = vmatpush.msra.mxu0 %v374
    %424 = vmatpush.msra.mxu0 %v373
    %425 = vmatmul.f32.gmra.mxu0 %v368
    %v426 = vpop.f32.mrf.mxu0
    %v427 = vadd.f32 %v407, %v426
    %428 = vmatmul.f32.gmra.mxu0 %v371
    %v429 = vpop.f32.mrf.mxu0
    %v430 = vadd.f32 %v407, %v429
    %431 = vdwg.mxu0
    %432 = vmatpush.msra.mxu0 %v404
    %433 = vmatpush.msra.mxu0 %v403
    %434 = vmatpush.msra.mxu0 %v402
    %435 = vmatpush.msra.mxu0 %v401
    %436 = vmatpush.msra.mxu0 %v400
    %437 = vmatpush.msra.mxu0 %v399
    %438 = vmatpush.msra.mxu0 %v398
    %439 = vmatpush.msra.mxu0 %v397
    %440 = vmatpush.msra.mxu0 %v396
    %441 = vmatpush.msra.mxu0 %v395
    %442 = vmatpush.msra.mxu0 %v394
    %443 = vmatpush.msra.mxu0 %v393
    %444 = vmatpush.msra.mxu0 %v392
    %445 = vmatpush.msra.mxu0 %v391
    %446 = vmatpush.msra.mxu0 %v390
    %447 = vmatpush.msra.mxu0 %v389
    %448 = vmatmul.f32.gmra.mxu0 %v348
    %v449 = vpop.f32.mrf.mxu0
    %v450 = vadd.f32 %v427, %v449
    %451 = vmatmul.f32.gmra.mxu0 %v349
    %v452 = vpop.f32.mrf.mxu0
    %v453 = vadd.f32 %v430, %v452
    %454 = vdwg.mxu0
    %v455 = vmax.f32 %v450, 0.0
    %v456 = vmax.f32 %v453, 0.0
    %v457 = vld [vmem:[#allocation7] sm:$0x7]
    %v459 = vsel %vm129, %v457, 0
    %461 = vmatpush.msra.mxu0 0.0
    %462 = vmatpush.msra.mxu0 0.0
    %463 = vmatpush.msra.mxu0 0.0
    %464 = vmatpush.msra.mxu0 0.0
    %465 = vmatpush.msra.mxu0 0.0
    %466 = vmatpush.msra.mxu0 0.0
    %467 = vmatpush.msra.mxu0 0.0
    %468 = vmatpush.msra.mxu0 0.0
    %469 = vmatpush.msra.mxu0 0.0
    %470 = vmatpush.msra.mxu0 0.0
    %471 = vmatpush.msra.mxu0 0.0
    %472 = vmatpush.msra.mxu0 0.0
    %473 = vmatpush.msra.mxu0 0.0
    %474 = vmatpush.msra.mxu0 0.0
    %475 = vmatpush.msra.mxu0 %v456
    %476 = vmatpush.msra.mxu0 %v455
    %477 = vmatmul.f32.gmra.mxu0 %v459
    %v478 = vpop.f32.mrf.mxu0
    %v479 = vadd.f32 0.0, %v478
    %480 = vdwg.mxu0
    %481 = vst [vmem:[#allocation13] sm:$0x7] %v479
    // Predicated region
    $region62: #{tpu_custom_call.1} parent=1 // pred_check
      _
    $region63: #{tpu_custom_call.1} parent=1 // pred_check_branch
      %483 = sbr.rel (0) target = $region65
    $region64: #{tpu_custom_call.1} parent=1 // pred_region
      %485 = vsyncadd [#allocation4], 0
      %s487 = sshll.u32 [#allocation13], 4
      %s488 = int_to_ptr.vmem [resolvable:$true] %s487
      %s489 = sshll.u32 %s9, 4
      %s490 = int_to_ptr.hbm [resolvable:$true] %s489
      %492 = dma.vmem_to_hbm [thread:$0]  %s488, 64, %s490, [#allocation4]
    $region65: #{tpu_custom_call.1} parent=1 // pred_fallthru
      _
    // Predicated region
    $region66: #{tpu_custom_call.1} parent=1 // pred_check
      _
    $region67: #{tpu_custom_call.1} parent=1 // pred_check_branch
      %494 = sbr.rel (0) target = $region69
    $region68: #{tpu_custom_call.1} parent=1 // pred_region
      %496 = dma.done [#allocation4], 64
    $region69: #{tpu_custom_call.1} parent=1 // pred_fallthru
      _
    %497 = vsyncpa [#allocation3], 1
    %498 = vsyncpa [#allocation6], 1
    %499 = vsyncpa [#allocation9], 1
    %500 = vsyncpa [#allocation12], 1
    %501 = vsyncpa [#allocation4], 1

</llo_original>
